<compile_context>
chip_gen: v5e
topology: v5e:2x2
jax: 0.10.0
libtpu: 0.0.40
codegen_flags: <defaults>
</compile_context>

<pallas_src>
import functools

import jax
import jax.numpy as jnp
from jax.experimental import pallas as pl
from jax.experimental.pallas import tpu as pltpu


def _pow_gamma(x, gamma):
    """x ** gamma for x >= 0, avoiding exp(g*log(x)) for (half-)integer gamma."""
    g = float(gamma)
    ig = int(g)
    if g == float(ig) and ig >= 1:
        r = x
        for _ in range(ig - 1):
            r = r * x
        return r
    if g > 0 and (2.0 * g) == float(int(2.0 * g)):
        # half-integer: x**n * sqrt(x)   (gamma = 1.5 -> x * sqrt(x))
        n = int(g - 0.5)
        r = jnp.sqrt(x)                      # single EUP op, robust at x == 0
        for _ in range(n):
            r = r * x
        return r
    # generic fallback (exp/log on EUP); clamp avoids any 0*(-inf) pow path.
    return jnp.maximum(x, jnp.float32(1e-20)) ** jnp.float32(g)


def _nr_dice_kernel(pred_ref, lab_ref, num_ref, p2_ref, *,
                    gamma, hw, tiles_per_split, apply_mask):
    j = pl.program_id(2)

    @pl.when(j == 0)
    def _init():
        num_ref[...] = jnp.zeros_like(num_ref)
        p2_ref[...] = jnp.zeros_like(p2_ref)

    x = pred_ref[...].astype(jnp.float32)                 # (C, Tsub, 128)
    C, tsub, lanes = x.shape

    # Softmax over the class axis: C is a leading "plane" axis, so max/sum are
    # elementwise VALU across C dense (Tsub, 128) planes (no sublane reduces).
    m = jnp.max(x, axis=0, keepdims=True)                 # (1, Tsub, 128)
    e = jnp.exp(x - m)                                    # EUP
    denom = jnp.sum(e, axis=0, keepdims=True)             # (1, Tsub, 128)
    inv = pl.reciprocal(denom, approx=False)              # exact, 1 per pixel
    p = e * inv                                           # (C, Tsub, 128)

    labels = lab_ref[...].astype(jnp.int32)               # (1, Tsub, 128)
    cls = jax.lax.broadcasted_iota(jnp.int32, p.shape, dimension=0)
    # one_hot then clamp(1e-4, 1.0): ones stay 1, zeros -> 1e-4.
    # Note: out-of-range labels give an all-1e-4 row (matches one_hot+clamp).
    oh = jnp.where(cls == labels, jnp.float32(1.0), jnp.float32(1e-4))

    diff = jnp.abs(p - oh)
    num_pix = jnp.sum(_pow_gamma(diff, gamma), axis=0)    # (Tsub, 128)
    p2_pix = jnp.sum(p * p, axis=0)                       # (Tsub, 128)

    if apply_mask:
        # Only traced when H*W was padded up to a multiple of 8*128: zero the
        # contribution of the padded pixels (their pred/label values are then
        # irrelevant).
        row0 = (pl.program_id(0) * tiles_per_split + j) * tsub
        rows = jax.lax.broadcasted_iota(jnp.int32, (tsub, lanes), 0) + row0
        cols = jax.lax.broadcasted_iota(jnp.int32, (tsub, lanes), 1)
        valid = ((rows * lanes + cols) < hw).astype(jnp.float32)
        num_pix = num_pix * valid
        p2_pix = p2_pix * valid

    # Fold (Tsub, 128) -> (8, 128) with pure elementwise adds (the reshape
    # matches the native sublane tiling, so it is free) and accumulate into
    # the VMEM-resident output block. No per-step cross-lane reduce or store.
    num_ref[...] += num_pix.reshape(tsub // 8, 8, lanes).sum(axis=0)[None, None]
    p2_ref[...] += p2_pix.reshape(tsub // 8, 8, lanes).sum(axis=0)[None, None]


def _select_tiling(R, C):
    """Pick the subrow tile (multiple of 8 dividing R) and a VMEM budget."""
    try:
        vmem_cap = pltpu.get_tpu_info().vmem_capacity_bytes
    except Exception:                      # unknown generation / no query
        vmem_cap = 0
    if vmem_cap >= (100 << 20):            # v5e / v6e: 128 MiB physical VMEM
        target_pred_bytes = 2 << 20        # ~2 MiB of f32 pred per grid step
        vmem_limit = 48 << 20              # headroom for ~10x f32 temporaries
    else:                                  # v7x (64 MiB) or unknown: stay small
        target_pred_bytes = 1 << 20
        vmem_limit = 32 << 20
    cap_rows = max(8, target_pred_bytes // (C * 128 * 4))
    tsub, t = 8, 8
    while t <= min(R, cap_rows):
        if R % t == 0:
            tsub = t
        t += 8
    return tsub, vmem_limit


def nr_dice_loss(pred, labels, *, num_class, gamma):
    """pred: (N, C, H, W) float logits, labels: (N, H, W) int class ids."""
    N, C, H, W = pred.shape
    assert C == num_class
    hw = H * W

    LANES, SUB = 128, 8
    hw_pad = -(-hw // (LANES * SUB)) * (LANES * SUB)
    pad = hw_pad - hw

    # Free, contiguous reshapes -- native NCHW kept, no wrapper transpose.
    pred3 = pred.reshape(N, C, hw)
    lab3 = labels.reshape(N, 1, hw)
    if not (jnp.issubdtype(lab3.dtype, jnp.integer) and lab3.dtype.itemsize == 1):
        lab3 = lab3.astype(jnp.int32)      # keep int8/uint8 labels narrow
    if pad:
        # TODO(synk): padding costs one extra HBM pass over pred when H*W is
        # not a multiple of 1024; a masked remainder tile would avoid it.
        pred3 = jnp.pad(pred3, ((0, 0), (0, 0), (0, pad)))
        lab3 = jnp.pad(lab3, ((0, 0), (0, 0), (0, pad)))

    R = hw_pad // LANES                    # multiple of 8 by construction
    pred4 = pred3.reshape(N, C, R, LANES)
    lab4 = lab3.reshape(N, 1, R, LANES)

    tsub, vmem_limit = _select_tiling(R, C)
    assert R % tsub == 0 and tsub % SUB == 0
    total_tiles = R // tsub
    n_split = 2 if total_tiles % 2 == 0 else 1   # keep both v7x TCs busy
    J = total_tiles // n_split

    kernel = functools.partial(_nr_dice_kernel, gamma=gamma, hw=hw,
                               tiles_per_split=J, apply_mask=pad > 0)
    num_part, p2_part = pl.pallas_call(
        kernel,
        out_shape=(
            jax.ShapeDtypeStruct((n_split, N, SUB, LANES), jnp.float32),
            jax.ShapeDtypeStruct((n_split, N, SUB, LANES), jnp.float32),
        ),
        grid_spec=pltpu.PrefetchScalarGridSpec(
            num_scalar_prefetch=0,
            grid=(n_split, N, J),
            in_specs=[
                pl.BlockSpec((pl.Squeezed(), C, tsub, LANES),
                             lambda s, n, j: (n, 0, s * J + j, 0)),
                pl.BlockSpec((pl.Squeezed(), 1, tsub, LANES),
                             lambda s, n, j: (n, 0, s * J + j, 0)),
            ],
            out_specs=[
                pl.BlockSpec((1, 1, SUB, LANES), lambda s, n, j: (s, n, 0, 0)),
                pl.BlockSpec((1, 1, SUB, LANES), lambda s, n, j: (s, n, 0, 0)),
            ],
        ),
        compiler_params=pltpu.CompilerParams(
            dimension_semantics=("parallel", "parallel", "arbitrary"),
            vmem_limit_bytes=vmem_limit),
    )(pred4, lab4)

    num = jnp.sum(num_part)
    p2 = jnp.sum(p2_part)
    # sum over C of clamp(one_hot)^2 is exactly 1 + (C-1)*1e-8 per real pixel.
    oh2 = jnp.float32(N * hw) * (jnp.float32(1.0)
                                 + jnp.float32(C - 1) * jnp.float32(1e-8))
    dice = num / (p2 + oh2 + jnp.float32(1e-6))
    return {"NR_dice": dice, "total": dice}


if __name__ == "__main__":
    # Synthetic "args": num_class=4, NR_Dice_gamma=1.5
    NUM_CLASS = 4
    GAMMA = 1.5

    key = jax.random.PRNGKey(0)
    k_pred, k_lab = jax.random.split(key)
    # NCHW logits, integer labels in [0, num_class)
    pred = jax.random.normal(k_pred, (2, NUM_CLASS, 16, 16), dtype=jnp.float32)
    labels = jax.random.randint(k_lab, (2, 16, 16), 0, NUM_CLASS, dtype=jnp.int32)

    out = nr_dice_loss(pred, labels, num_class=NUM_CLASS, gamma=GAMMA)
    jax.block_until_ready(out["total"])

    # Pure-JAX reference check (same math, no kernel).
    p = jax.nn.softmax(pred, axis=1)
    oh = jnp.clip(
        jnp.transpose(jax.nn.one_hot(labels, NUM_CLASS, dtype=jnp.float32),
                      (0, 3, 1, 2)),
        1e-4, 1.0)
    ref = (jnp.abs(p - oh) ** GAMMA).sum() / ((p ** 2).sum() + (oh ** 2).sum() + 1e-6)
    assert jnp.allclose(out["NR_dice"], ref, rtol=1e-4, atol=1e-6), (out["NR_dice"], ref)

    print("KERNEL_OK")
</pallas_src>

<mosaic_0001>
module attributes {stable_mosaic.version = 11 : i64} {
  func.func @_nr_dice_kernel(%arg0: i32, %arg1: i32, %arg2: i32, %arg3: memref<1x4x8x128xf32, #tpu.memory_space<vmem>>, %arg4: memref<1x1x8x128xi32, #tpu.memory_space<vmem>>, %arg5: memref<1x1x8x128xf32, #tpu.memory_space<vmem>>, %arg6: memref<1x1x8x128xf32, #tpu.memory_space<vmem>>) attributes {dimension_semantics = [#tpu.dimension_semantics<parallel>, #tpu.dimension_semantics<parallel>, #tpu.dimension_semantics<arbitrary>], iteration_bounds = array<i64: 1, 2, 1>, scalar_prefetch = 0 : i64, scratch_operands = 0 : i64, tpu.core_type = #tpu.core_type<tc>, window_params = [{transform_indices = @transform_0, window_bounds = array<i64: 1, 4, 8, 128>}, {transform_indices = @transform_1, window_bounds = array<i64: 1, 1, 8, 128>}, {transform_indices = @transform_2, window_bounds = array<i64: 1, 1, 8, 128>}, {transform_indices = @transform_3, window_bounds = array<i64: 1, 1, 8, 128>}]} {
    %c0_i32 = arith.constant 0 : i32
    %0 = arith.cmpi eq, %arg2, %c0_i32 : i32
    %1 = arith.extui %0 : i1 to i32
    %c0_i32_0 = arith.constant 0 : i32
    %2 = arith.cmpi ne, %1, %c0_i32_0 : i32
    scf.if %2 {
      %cst_31 = arith.constant 0.000000e+00 : f32
      %58 = vector.broadcast %cst_31 : f32 to vector<1x1x8x128xf32>
      %c0_32 = arith.constant 0 : index
      %c0_33 = arith.constant 0 : index
      %c0_34 = arith.constant 0 : index
      %c0_35 = arith.constant 0 : index
      %59 = vector.load %arg5[%c0_32, %c0_33, %c0_34, %c0_35] : memref<1x1x8x128xf32, #tpu.memory_space<vmem>>, vector<1x1x8x128xf32>
      tpu.vector_store %arg5[%c0_32, %c0_33, %c0_34, %c0_35], %58 {strides = array<i32>} : memref<1x1x8x128xf32, #tpu.memory_space<vmem>>, vector<1x1x8x128xf32>,
      %cst_36 = arith.constant 0.000000e+00 : f32
      %60 = vector.broadcast %cst_36 : f32 to vector<1x1x8x128xf32>
      %c0_37 = arith.constant 0 : index
      %c0_38 = arith.constant 0 : index
      %c0_39 = arith.constant 0 : index
      %c0_40 = arith.constant 0 : index
      %61 = vector.load %arg6[%c0_37, %c0_38, %c0_39, %c0_40] : memref<1x1x8x128xf32, #tpu.memory_space<vmem>>, vector<1x1x8x128xf32>
      tpu.vector_store %arg6[%c0_37, %c0_38, %c0_39, %c0_40], %60 {strides = array<i32>} : memref<1x1x8x128xf32, #tpu.memory_space<vmem>>, vector<1x1x8x128xf32>,
    } else {
    }
    %c0 = arith.constant 0 : index
    %c0_1 = arith.constant 0 : index
    %c0_2 = arith.constant 0 : index
    %c0_3 = arith.constant 0 : index
    %3 = vector.load %arg3[%c0, %c0_1, %c0_2, %c0_3] : memref<1x4x8x128xf32, #tpu.memory_space<vmem>>, vector<1x4x8x128xf32>
    %4 = vector.shape_cast %3 : vector<1x4x8x128xf32> to vector<4x8x128xf32>
    %cst = arith.constant dense<0xFF800000> : vector<8x128xf32>
    %5 = vector.multi_reduction <maximumf>, %4, %cst [0] : vector<4x8x128xf32> to vector<8x128xf32>
    %6 = vector.shape_cast %5 : vector<8x128xf32> to vector<1x8x128xf32>
    %7 = vector.broadcast %6 : vector<1x8x128xf32> to vector<4x8x128xf32>
    %8 = arith.subf %4, %7 : vector<4x8x128xf32>
    %9 = math.exp %8 : vector<4x8x128xf32>
    %cst_4 = arith.constant dense<0.000000e+00> : vector<8x128xf32>
    %10 = vector.multi_reduction <add>, %9, %cst_4 [0] : vector<4x8x128xf32> to vector<8x128xf32>
    %11 = vector.shape_cast %10 : vector<8x128xf32> to vector<1x8x128xf32>
    %12 = tpu.reciprocal %11 : vector<1x8x128xf32> -> vector<1x8x128xf32>
    %13 = vector.broadcast %12 : vector<1x8x128xf32> to vector<4x8x128xf32>
    %14 = arith.mulf %9, %13 : vector<4x8x128xf32>
    %c0_5 = arith.constant 0 : index
    %c0_6 = arith.constant 0 : index
    %c0_7 = arith.constant 0 : index
    %c0_8 = arith.constant 0 : index
    %15 = vector.load %arg4[%c0_5, %c0_6, %c0_7, %c0_8] : memref<1x1x8x128xi32, #tpu.memory_space<vmem>>, vector<1x1x8x128xi32>
    %16 = vector.shape_cast %15 : vector<1x1x8x128xi32> to vector<1x8x128xi32>
    %17 = tpu.iota {dimensions = array<i32: 0>} : vector<4x8x128xi32>
    %18 = vector.broadcast %16 : vector<1x8x128xi32> to vector<4x8x128xi32>
    %19 = arith.cmpi eq, %17, %18 : vector<4x8x128xi32>
    %cst_9 = arith.constant 1.000000e+00 : f32
    %cst_10 = arith.constant 9.99999974E-5 : f32
    %20 = vector.broadcast %cst_9 : f32 to vector<4x8x128xf32>
    %21 = vector.broadcast %cst_10 : f32 to vector<4x8x128xf32>
    %22 = arith.select %19, %20, %21 : vector<4x8x128xi1>, vector<4x8x128xf32>
    %23 = arith.subf %14, %22 : vector<4x8x128xf32>
    %24 = math.absf %23 : vector<4x8x128xf32>
    %25 = math.sqrt %24 : vector<4x8x128xf32>
    %26 = arith.mulf %25, %24 : vector<4x8x128xf32>
    %cst_11 = arith.constant dense<0.000000e+00> : vector<8x128xf32>
    %27 = vector.multi_reduction <add>, %26, %cst_11 [0] : vector<4x8x128xf32> to vector<8x128xf32>
    %28 = arith.mulf %14, %14 : vector<4x8x128xf32>
    %cst_12 = arith.constant dense<0.000000e+00> : vector<8x128xf32>
    %29 = vector.multi_reduction <add>, %28, %cst_12 [0] : vector<4x8x128xf32> to vector<8x128xf32>
    %c1_i32 = arith.constant 1 : i32
    %30 = arith.muli %arg0, %c1_i32 : i32
    %31 = arith.addi %30, %arg2 : i32
    %c8_i32 = arith.constant 8 : i32
    %32 = arith.muli %31, %c8_i32 : i32
    %33 = tpu.iota {dimensions = array<i32: 0>} : vector<8x128xi32>
    %34 = vector.broadcast %32 : i32 to vector<8x128xi32>
    %35 = arith.addi %33, %34 : vector<8x128xi32>
    %36 = tpu.iota {dimensions = array<i32: 1>} : vector<8x128xi32>
    %c128_i32 = arith.constant 128 : i32
    %37 = vector.broadcast %c128_i32 : i32 to vector<8x128xi32>
    %38 = arith.muli %35, %37 : vector<8x128xi32>
    %39 = arith.addi %38, %36 : vector<8x128xi32>
    %c256_i32 = arith.constant 256 : i32
    %40 = vector.broadcast %c256_i32 : i32 to vector<8x128xi32>
    %41 = arith.cmpi slt, %39, %40 : vector<8x128xi32>
    %42 = arith.extui %41 : vector<8x128xi1> to vector<8x128xi32>
    %43 = arith.sitofp %42 : vector<8x128xi32> to vector<8x128xf32>
    %44 = arith.mulf %27, %43 : vector<8x128xf32>
    %45 = arith.mulf %29, %43 : vector<8x128xf32>
    %c0_13 = arith.constant 0 : index
    %c0_14 = arith.constant 0 : index
    %c0_15 = arith.constant 0 : index
    %c0_16 = arith.constant 0 : index
    %46 = vector.load %arg5[%c0_13, %c0_14, %c0_15, %c0_16] : memref<1x1x8x128xf32, #tpu.memory_space<vmem>>, vector<1x1x8x128xf32>
    %47 = vector.shape_cast %44 : vector<8x128xf32> to vector<1x8x128xf32>
    %cst_17 = arith.constant dense<0.000000e+00> : vector<8x128xf32>
    %48 = vector.multi_reduction <add>, %47, %cst_17 [0] : vector<1x8x128xf32> to vector<8x128xf32>
    %49 = vector.shape_cast %48 : vector<8x128xf32> to vector<1x1x8x128xf32>
    %50 = arith.addf %46, %49 : vector<1x1x8x128xf32>
    %c0_18 = arith.constant 0 : index
    %c0_19 = arith.constant 0 : index
    %c0_20 = arith.constant 0 : index
    %c0_21 = arith.constant 0 : index
    %51 = vector.load %arg5[%c0_18, %c0_19, %c0_20, %c0_21] : memref<1x1x8x128xf32, #tpu.memory_space<vmem>>, vector<1x1x8x128xf32>
    tpu.vector_store %arg5[%c0_18, %c0_19, %c0_20, %c0_21], %50 {strides = array<i32>} : memref<1x1x8x128xf32, #tpu.memory_space<vmem>>, vector<1x1x8x128xf32>,
    %c0_22 = arith.constant 0 : index
    %c0_23 = arith.constant 0 : index
    %c0_24 = arith.constant 0 : index
    %c0_25 = arith.constant 0 : index
    %52 = vector.load %arg6[%c0_22, %c0_23, %c0_24, %c0_25] : memref<1x1x8x128xf32, #tpu.memory_space<vmem>>, vector<1x1x8x128xf32>
    %53 = vector.shape_cast %45 : vector<8x128xf32> to vector<1x8x128xf32>
    %cst_26 = arith.constant dense<0.000000e+00> : vector<8x128xf32>
    %54 = vector.multi_reduction <add>, %53, %cst_26 [0] : vector<1x8x128xf32> to vector<8x128xf32>
    %55 = vector.shape_cast %54 : vector<8x128xf32> to vector<1x1x8x128xf32>
    %56 = arith.addf %52, %55 : vector<1x1x8x128xf32>
    %c0_27 = arith.constant 0 : index
    %c0_28 = arith.constant 0 : index
    %c0_29 = arith.constant 0 : index
    %c0_30 = arith.constant 0 : index
    %57 = vector.load %arg6[%c0_27, %c0_28, %c0_29, %c0_30] : memref<1x1x8x128xf32, #tpu.memory_space<vmem>>, vector<1x1x8x128xf32>
    tpu.vector_store %arg6[%c0_27, %c0_28, %c0_29, %c0_30], %56 {strides = array<i32>} : memref<1x1x8x128xf32, #tpu.memory_space<vmem>>, vector<1x1x8x128xf32>,
    return
  }
  func.func @transform_0(%arg0: i32, %arg1: i32, %arg2: i32) -> (i32, i32, i32, i32) {
    %c1_i32 = arith.constant 1 : i32
    %0 = arith.muli %arg0, %c1_i32 : i32
    %1 = arith.addi %0, %arg2 : i32
    %c0_i32 = arith.constant 0 : i32
    %c0_i32_0 = arith.constant 0 : i32
    %c0_i32_1 = arith.constant 0 : i32
    return %arg1, %c0_i32, %1, %c0_i32_0 : i32, i32, i32, i32
  }
  func.func @transform_1(%arg0: i32, %arg1: i32, %arg2: i32) -> (i32, i32, i32, i32) {
    %c1_i32 = arith.constant 1 : i32
    %0 = arith.muli %arg0, %c1_i32 : i32
    %1 = arith.addi %0, %arg2 : i32
    %c0_i32 = arith.constant 0 : i32
    %c0_i32_0 = arith.constant 0 : i32
    %c0_i32_1 = arith.constant 0 : i32
    return %arg1, %c0_i32, %1, %c0_i32_0 : i32, i32, i32, i32
  }
  func.func @transform_2(%arg0: i32, %arg1: i32, %arg2: i32) -> (i32, i32, i32, i32) {
    %c0_i32 = arith.constant 0 : i32
    %c0_i32_0 = arith.constant 0 : i32
    %c0_i32_1 = arith.constant 0 : i32
    return %arg0, %arg1, %c0_i32, %c0_i32_0 : i32, i32, i32, i32
  }
  func.func @transform_3(%arg0: i32, %arg1: i32, %arg2: i32) -> (i32, i32, i32, i32) {
    %c0_i32 = arith.constant 0 : i32
    %c0_i32_0 = arith.constant 0 : i32
    %c0_i32_1 = arith.constant 0 : i32
    return %arg0, %arg1, %c0_i32, %c0_i32_0 : i32, i32, i32, i32
  }
}

</mosaic_0001>

<llo_original>
// kernel: tpu_custom_call.1
$region0: #{tpu_custom_call.1}
  #allocation0 [shape = 'u32[]', space=smem, size = 0x4, offset = 0x4, fixed_abs, tag = 'smem constant byte address 0x4 - core index']
  #allocation1 [shape = 'u32[72,128]{1,0:T(1,128)}', space=vmem, size = 0x9000, scoped, tag = 'internal scratch']
  %s0 = inlined_call_operand.hbm [shape: f32[2,4,8,128], index: 0, kind: input, shape index: {}]
  %s1 = inlined_call_operand.hbm [shape: s32[2,1,8,128], index: 1, kind: input, shape index: {}]
  %s2 = inlined_call_operand.hbm [shape: f32[1,2,8,128], index: 2, kind: output, shape index: {0}]
  %s3 = inlined_call_operand.hbm [shape: f32[1,2,8,128], index: 3, kind: output, shape index: {1}]
  %4 = xla_tuple %s2, %s3
  %s5 = sld [smem:[#allocation0]]
  $region61: #{tpu_custom_call.1} parent=0
    _
  %s7 = ssub.s32 1, %s5
  %s8 = scalar_select 0, %s7, %s5
  $region1: #{tpu_custom_call.1} parent=0
    #allocation2 [shape = 'u8[32768]{0}', space=vmem, size = 0x8000, scoped, tag = 'input window, operand 0']
    #allocation3 [shape = 's32[2]{0}', space=sflag, size = 0x8, scoped, tag = 'scoped memory for tpu_custom_call.1']
    #allocation4 [shape = 's32[2]{0}', space=sflag, size = 0x8, scoped, tag = 'scoped memory for tpu_custom_call.1']
    #allocation5 [shape = 'u8[8192]{0}', space=vmem, size = 0x2000, scoped, tag = 'input window, operand 1']
    #allocation6 [shape = 's32[2]{0}', space=sflag, size = 0x8, scoped, tag = 'scoped memory for tpu_custom_call.1']
    #allocation7 [shape = 'u8[8192]{0}', space=vmem, size = 0x2000, scoped, tag = 'output window, operand 0']
    #allocation8 [shape = 'u8[8192]{0}', space=vmem, size = 0x2000, scoped, tag = 'output window, operand 1']
    #allocation9 [shape = 's32[2]{0}', space=sflag, size = 0x8, scoped, tag = 'scoped memory for tpu_custom_call.1']
    %9 = vsyncpa [#allocation3], 0
    %s10 = scalar_lea.sflag [#allocation3], 1
    %11 = vsyncpa %s10, 0
    %12 = vsyncpa [#allocation6], 0
    %s13 = scalar_lea.sflag [#allocation6], 1
    %14 = vsyncpa %s13, 0
    %15 = vsyncpa [#allocation4], 0
    %s16 = scalar_lea.sflag [#allocation4], 1
    %17 = vsyncpa %s16, 0
    %18 = vsyncpa [#allocation9], 0
    %s19 = scalar_lea.sflag [#allocation9], 1
    %20 = vsyncpa %s19, 0
    loop: start=0, step=1, limit=4
    $region2: #{tpu_custom_call.1} parent=1 // loop_pre_header
      _
    $region3: #{tpu_custom_call.1} parent=1 // loop_header
      %s22 = sphi 0, %s26
      %p23 = scmp.ge.s32.totalorder %s22, 4
      %s29 = sphi 0, %s48
      %s30 = sphi 0, %s44
      %s31 = sphi 0, %s40
      %s32 = sphi 0, %s29
      %s33 = sphi 0, %s30
      %s34 = sphi 0, %s31
      %s35 = sphi 0, %s32
      %s36 = sphi 0, %s33
      %s37 = sphi 0, %s34
      %s55 = sphi 0, %s57
      %s58 = sphi 0, %s55
      %s59 = sphi 0, %s58
      %s75 = sphi 0, %s59
      %s85 = sphi 0, %s87
      %s88 = sphi 0, %s85
      %s89 = sphi 0, %s88
      %s105 = sphi 0, %s89
      %s113 = sphi 0, %s115
      %s116 = sphi 0, %s113
      %s117 = sphi 0, %s116
      %s133 = sphi 0, %s117
      %s141 = sphi 0, %s143
      %s144 = sphi 0, %s141
      %s145 = sphi 0, %s144
      %s161 = sphi 0, %s145
    $region4: #{tpu_custom_call.1} parent=1 // loop_header_branch
      %25 = sbr.rel (%p23) target = $region8
    $region5: #{tpu_custom_call.1} parent=1 // loop_body
      %s27 = ssub.s32 %s22, 1
      %s28 = ssub.s32 %s22, 2
      %s38 = sadd.s32 1, %s31
      %p39 = scmp.ge.s32.totalorder %s38, 1
      %s40 = scalar_select %p39, 0, %s38
      %s41 = sadd.s32 1, %s30
      %s42 = scalar_select %p39, %s41, %s30
      %p43 = scmp.ge.s32.totalorder %s42, 2
      %s44 = scalar_select %p43, 0, %s42
      %s45 = sadd.s32 1, %s29
      %s46 = scalar_select %p43, %s45, %s29
      %p47 = scmp.ge.s32.totalorder %s46, 1
      %s48 = scalar_select %p47, 0, %s46
      %s49 = sadd.s32 %s29, %s31
      %s50 = sadd.s32 %s48, %s40
      %s51 = ssub.s32 %s30, %s44
      %s52 = ssub.s32 %s49, %s50
      %s53 = sor.u32 %s51, %s52
      %p54 = scmp.eq.s32.totalorder %s53, 0
      %s56 = sadd.s32 %s55, 1
      %s57 = scalar_select %p54, %s55, %s56
      %p60 = pneg %p54
      %p61 = scmp.eq.s32.totalorder %s22, 1
      %p62 = por %p60, %p61
      %p63 = scmp.ne.s32.totalorder %s55, %s58
      %p64 = scmp.eq.s32.totalorder %s22, 0
      %p65 = por %p63, %p64
      %p66 = scmp.ne.s32.totalorder %s55, %s58
      %p67 = scmp.eq.s32.totalorder %s27, 1
      %p68 = por %p66, %p67
      %p69 = scmp.ne.s32.totalorder %s58, %s59
      %p70 = scmp.eq.s32.totalorder %s27, 0
      %p71 = por %p69, %p70
      %p72 = scmp.ne.s32.totalorder %s58, %s59
      %p73 = scmp.eq.s32.totalorder %s28, 1
      %p74 = por %p72, %p73
      %p76 = scmp.ne.s32.totalorder %s59, %s75
      %p77 = scmp.eq.s32.totalorder %s28, 0
      %p78 = por %p76, %p77
      %s79 = sadd.s32 %s29, %s31
      %s80 = sadd.s32 %s48, %s40
      %s81 = ssub.s32 %s30, %s44
      %s82 = ssub.s32 %s79, %s80
      %s83 = sor.u32 %s81, %s82
      %p84 = scmp.eq.s32.totalorder %s83, 0
      %s86 = sadd.s32 %s85, 1
      %s87 = scalar_select %p84, %s85, %s86
      %p90 = pneg %p84
      %p91 = scmp.eq.s32.totalorder %s22, 1
      %p92 = por %p90, %p91
      %p93 = scmp.ne.s32.totalorder %s85, %s88
      %p94 = scmp.eq.s32.totalorder %s22, 0
      %p95 = por %p93, %p94
      %p96 = scmp.ne.s32.totalorder %s85, %s88
      %p97 = scmp.eq.s32.totalorder %s27, 1
      %p98 = por %p96, %p97
      %p99 = scmp.ne.s32.totalorder %s88, %s89
      %p100 = scmp.eq.s32.totalorder %s27, 0
      %p101 = por %p99, %p100
      %p102 = scmp.ne.s32.totalorder %s88, %s89
      %p103 = scmp.eq.s32.totalorder %s28, 1
      %p104 = por %p102, %p103
      %p106 = scmp.ne.s32.totalorder %s89, %s105
      %p107 = scmp.eq.s32.totalorder %s28, 0
      %p108 = por %p106, %p107
      %s109 = ssub.s32 %s29, %s48
      %s110 = ssub.s32 %s30, %s44
      %s111 = sor.u32 %s109, %s110
      %p112 = scmp.eq.s32.totalorder %s111, 0
      %s114 = sadd.s32 %s113, 1
      %s115 = scalar_select %p112, %s113, %s114
      %p118 = pneg %p112
      %p119 = scmp.eq.s32.totalorder %s22, 1
      %p120 = por %p118, %p119
      %p121 = scmp.ne.s32.totalorder %s113, %s116
      %p122 = scmp.eq.s32.totalorder %s22, 0
      %p123 = por %p121, %p122
      %p124 = scmp.ne.s32.totalorder %s113, %s116
      %p125 = scmp.eq.s32.totalorder %s27, 1
      %p126 = por %p124, %p125
      %p127 = scmp.ne.s32.totalorder %s116, %s117
      %p128 = scmp.eq.s32.totalorder %s27, 0
      %p129 = por %p127, %p128
      %p130 = scmp.ne.s32.totalorder %s116, %s117
      %p131 = scmp.eq.s32.totalorder %s28, 1
      %p132 = por %p130, %p131
      %p134 = scmp.ne.s32.totalorder %s117, %s133
      %p135 = scmp.eq.s32.totalorder %s28, 0
      %p136 = por %p134, %p135
      %s137 = ssub.s32 %s29, %s48
      %s138 = ssub.s32 %s30, %s44
      %s139 = sor.u32 %s137, %s138
      %p140 = scmp.eq.s32.totalorder %s139, 0
      %s142 = sadd.s32 %s141, 1
      %s143 = scalar_select %p140, %s141, %s142
      %p146 = pneg %p140
      %p147 = scmp.eq.s32.totalorder %s22, 1
      %p148 = por %p146, %p147
      %p149 = scmp.ne.s32.totalorder %s141, %s144
      %p150 = scmp.eq.s32.totalorder %s22, 0
      %p151 = por %p149, %p150
      %p152 = scmp.ne.s32.totalorder %s141, %s144
      %p153 = scmp.eq.s32.totalorder %s27, 1
      %p154 = por %p152, %p153
      %p155 = scmp.ne.s32.totalorder %s144, %s145
      %p156 = scmp.eq.s32.totalorder %s27, 0
      %p157 = por %p155, %p156
      %p158 = scmp.ne.s32.totalorder %s144, %s145
      %p159 = scmp.eq.s32.totalorder %s28, 1
      %p160 = por %p158, %p159
      %p162 = scmp.ne.s32.totalorder %s145, %s161
      %p163 = scmp.eq.s32.totalorder %s28, 0
      %p164 = por %p162, %p163
      %p165 = scmp.le.s32.totalorder 1, %s22
      %p166 = scmp.lt.s32.totalorder %s22, 3
      %p167 = pnand %p165, %p166
      %p168 = pneg %p167
      // Predicated region
      $region9: #{tpu_custom_call.1} parent=5 // pred_check
        _
      $region10: #{tpu_custom_call.1} parent=5 // pred_check_branch
        %170 = sbr.rel (%p167) target = $region12
      $region11: #{tpu_custom_call.1} parent=5 // pred_region
        %s171 = ssub.s32 %s22, 1
      $region12: #{tpu_custom_call.1} parent=5 // pred_fallthru
        _
      %p172 = scmp.lt.s32.totalorder %s22, 2
      // Predicated region
      $region13: #{tpu_custom_call.1} parent=5 // pred_check
        %p173 = pneg %p172
      $region14: #{tpu_custom_call.1} parent=5 // pred_check_branch
        %175 = sbr.rel (%p173) target = $region16
      $region15: #{tpu_custom_call.1} parent=5 // pred_region
        // Predicated region
        $region17: #{tpu_custom_call.1} parent=15 // pred_check
          %p176 = pneg %p65
        $region18: #{tpu_custom_call.1} parent=15 // pred_check_branch
          %178 = sbr.rel (%p176) target = $region20
        $region19: #{tpu_custom_call.1} parent=15 // pred_region
          %s179 = sand.u32 %s55, 1
          %s180 = scalar_lea.sflag [#allocation3], %s179
          %s181 = sand.u32 %s55, 1
          %s182 = smul.addr %s181, 32
          %s183 = scalar_lea.vmem [#allocation2], %s182
          %s184 = sadd.s32 %s29, %s31
          %186 = vsyncadd %s180, 0
          %s187 = smul.addr %s30, 4
          %s188 = sadd.s32 %s184, %s187
          %s189 = smul.addr %s188, 8
          %s190 = scalar_lea.hbm %s0, %s189
          %s191 = sshll.u32 %s190, 4
          %s192 = int_to_ptr.hbm [resolvable:$true] %s191
          %s193 = sshll.u32 %s183, 4
          %s194 = int_to_ptr.vmem [resolvable:$true] %s193
          %199 = dma.hbm_to_vmem [thread:$0]  %s192, 512, %s194, %s180, 128, 128, 8
        $region20: #{tpu_custom_call.1} parent=15 // pred_fallthru
          _
        // Predicated region
        $region21: #{tpu_custom_call.1} parent=15 // pred_check
          %p200 = pneg %p95
        $region22: #{tpu_custom_call.1} parent=15 // pred_check_branch
          %202 = sbr.rel (%p200) target = $region24
        $region23: #{tpu_custom_call.1} parent=15 // pred_region
          %s203 = sand.u32 %s85, 1
          %s204 = scalar_lea.sflag [#allocation6], %s203
          %s205 = sand.u32 %s85, 1
          %s206 = smul.addr %s205, 8
          %s207 = scalar_lea.vmem [#allocation5], %s206
          %s208 = sadd.s32 %s29, %s31
          %210 = vsyncadd %s204, 0
          %s211 = sadd.s32 %s208, %s30
          %s212 = smul.addr %s211, 8
          %s213 = scalar_lea.hbm %s1, %s212
          %s215 = sshll.u32 %s213, 4
          %s216 = int_to_ptr.hbm [resolvable:$true] %s215
          %s217 = sshll.u32 %s207, 4
          %s218 = int_to_ptr.vmem [resolvable:$true] %s217
          %220 = dma.hbm_to_vmem [thread:$0]  %s216, 128, %s218, %s204
        $region24: #{tpu_custom_call.1} parent=15 // pred_fallthru
          _
      $region16: #{tpu_custom_call.1} parent=5 // pred_fallthru
        _
      %p221 = scmp.le.s32.totalorder 1, %s22
      %p222 = scmp.lt.s32.totalorder %s22, 3
      %p223 = pnand %p221, %p222
      %p224 = pneg %p223
      // Predicated region
      $region25: #{tpu_custom_call.1} parent=5 // pred_check
        _
      $region26: #{tpu_custom_call.1} parent=5 // pred_check_branch
        %226 = sbr.rel (%p223) target = $region28
      $region27: #{tpu_custom_call.1} parent=5 // pred_region
        %s227 = ssub.s32 %s22, 1
        %s228 = sand.u32 %s58, 1
        %s229 = scalar_lea.sflag [#allocation3], %s228
        %s230 = sand.u32 %s58, 1
        %s231 = smul.addr %s230, 32
        %s232 = scalar_lea.vmem [#allocation2], %s231
        // Predicated region
        $region29: #{tpu_custom_call.1} parent=27 // pred_check
          %p233 = pneg %p71
        $region30: #{tpu_custom_call.1} parent=27 // pred_check_branch
          %235 = sbr.rel (%p233) target = $region32
        $region31: #{tpu_custom_call.1} parent=27 // pred_region
          %237 = dma.done %s229, 512
        $region32: #{tpu_custom_call.1} parent=27 // pred_fallthru
          _
        %s238 = sand.u32 %s88, 1
        %s239 = scalar_lea.sflag [#allocation6], %s238
        %s240 = sand.u32 %s88, 1
        %s241 = smul.addr %s240, 8
        %s242 = scalar_lea.vmem [#allocation5], %s241
        // Predicated region
        $region33: #{tpu_custom_call.1} parent=27 // pred_check
          %p243 = pneg %p101
        $region34: #{tpu_custom_call.1} parent=27 // pred_check_branch
          %245 = sbr.rel (%p243) target = $region36
        $region35: #{tpu_custom_call.1} parent=27 // pred_region
          %247 = dma.done %s239, 128
        $region36: #{tpu_custom_call.1} parent=27 // pred_fallthru
          _
        %s248 = sand.u32 %s58, 1
        %s249 = scalar_lea.sflag [#allocation3], %s248
        %s250 = sand.u32 %s58, 1
        %s251 = smul.addr %s250, 32
        %s252 = scalar_lea.vmem [#allocation2], %s251
        %p253 = pneg %p71
        %p254 = pneg %p68
        %s255 = sand.u32 %s88, 1
        %s256 = scalar_lea.sflag [#allocation6], %s255
        %s257 = sand.u32 %s88, 1
        %s258 = smul.addr %s257, 8
        %s259 = scalar_lea.vmem [#allocation5], %s258
        %p260 = pneg %p101
        %p261 = pneg %p98
        %p262 = pneg %p129
        %p263 = pneg %p126
        %s264 = sand.u32 %s116, 1
        %s265 = scalar_lea.sflag [#allocation4], %s264
        %s266 = sand.u32 %s116, 1
        %s267 = smul.addr %s266, 8
        %s268 = scalar_lea.vmem [#allocation7], %s267
        %p269 = pneg %p157
        %p270 = pneg %p154
        %s271 = sand.u32 %s144, 1
        %s272 = scalar_lea.sflag [#allocation9], %s271
        %s273 = sand.u32 %s144, 1
        %s274 = smul.addr %s273, 8
        %s275 = scalar_lea.vmem [#allocation8], %s274
        %s276 = sadd.s32 %s32, %s34
        %s277 = sadd.s32 %s32, %s34
        %p278 = scmp.eq.s32.totalorder %s34, 0
        // Predicated region
        $region37: #{tpu_custom_call.1} parent=27 // pred_check
          %p279 = pneg %p278
        $region38: #{tpu_custom_call.1} parent=27 // pred_check_branch
          %281 = sbr.rel (%p279) target = $region40
        $region39: #{tpu_custom_call.1} parent=27 // pred_region
          %282 = vst [vmem:[%s268] sm:$0xff] 0.0
          %283 = vst [vmem:[%s275] sm:$0xff] 0.0
        $region40: #{tpu_custom_call.1} parent=27 // pred_fallthru
          _
        %v284 = vld [vmem:[%s232] sm:$0xff]
        %v285 = vld [vmem:[%s232 + $0x8] sm:$0xff]
        %v286 = vld [vmem:[%s232 + $0x10] sm:$0xff]
        %v287 = vld [vmem:[%s232 + $0x18] sm:$0xff]
        %v288 = vmax.f32 %v284, %v285
        %v289 = vmax.f32 %v286, %v287
        %v290 = vmax.f32 %v288, %v289
        %v291 = vsub.f32 %v284, %v290
        %v292 = vsub.f32 %v285, %v290
        %v293 = vsub.f32 %v286, %v290
        %v294 = vsub.f32 %v287, %v290
        %v295 = vmul.f32 %v291, 1.442695
        %v296 = vpow.pop %v295
        %v297 = vmul.f32 %v292, 1.442695
        %v298 = vpow.pop %v297
        %v299 = vmul.f32 %v293, 1.442695
        %v300 = vpow.pop %v299
        %v301 = vmul.f32 %v294, 1.442695
        %v302 = vpow.pop %v301
        %v303 = vadd.f32 %v296, %v298
        %v304 = vadd.f32 %v303, %v300
        %v305 = vadd.f32 %v304, %v302
        %v306 = vrcp.pop %v305
        %v307 = vmul.f32 %v305, %v306
        %v308 = vsub.f32 1.0, %v307
        %v309 = vmul.f32 %v306, %v308
        %v310 = vadd.f32 %v306, %v309
        %vm311 = vweird.f32 %v305
        %vm312 = vweird.f32 %v306
        %vm313 = vmor %vm311, %vm312
        %v314 = vsel %vm313, %v306, %v310
        %v315 = vand.u32 2147483647, %v305
        %vm316 = vcmp.eq.f32.partialorder %v315, 8.507059e+37
        %v317 = vand.u32 %v305, 2147483648
        %v318 = vor.u32 1.1754944e-38, %v317
        %v319 = vsel %vm316, %v318, %v314
        %v320 = vmul.f32 %v296, %v319
        %v321 = vmul.f32 %v298, %v319
        %v322 = vmul.f32 %v300, %v319
        %v323 = vmul.f32 %v302, %v319
        %v324 = vld [vmem:[%s242] sm:$0xff]
        %vm325 = vcmp.eq.s32.totalorder %v324, 0
        %vm326 = vcmp.eq.s32.totalorder %v324, 1
        %vm327 = vcmp.eq.s32.totalorder %v324, 2
        %vm328 = vcmp.eq.s32.totalorder %v324, 3
        %v329 = vsel %vm325, 1.0, 0.0001
        %v330 = vsel %vm326, 1.0, 0.0001
        %v331 = vsel %vm327, 1.0, 0.0001
        %v332 = vsel %vm328, 1.0, 0.0001
        %v333 = vsub.f32 %v320, %v329
        %v334 = vsub.f32 %v321, %v330
        %v335 = vsub.f32 %v322, %v331
        %v336 = vsub.f32 %v323, %v332
        %v337 = vand.u32 2147483647, %v333
        %v338 = vand.u32 2147483647, %v334
        %v339 = vand.u32 2147483647, %v335
        %v340 = vand.u32 2147483647, %v336
        %v341 = vrsqrt.pop %v337
        %v342 = vmul.f32 %v341, %v337
        %v343 = vmul.f32 %v342, %v341
        %v344 = vmul.f32 0.5, %v343
        %v345 = vsub.f32 1.5, %v344
        %v346 = vmul.f32 %v341, %v345
        %v347 = vmul.f32 %v337, %v346
        %vm348 = vcmp.eq.f32.partialorder %v337, inf
        %v349 = vsel %vm348, %v337, %v347
        %vm350 = vcmp.eq.f32.partialorder %v337, 0.0
        %v351 = vand.u32 %v337, 2147483648
        %v352 = vsel %vm350, %v351, %v349
        %v353 = vrsqrt.pop %v338
        %v354 = vmul.f32 %v353, %v338
        %v355 = vmul.f32 %v354, %v353
        %v356 = vmul.f32 0.5, %v355
        %v357 = vsub.f32 1.5, %v356
        %v358 = vmul.f32 %v353, %v357
        %v359 = vmul.f32 %v338, %v358
        %vm360 = vcmp.eq.f32.partialorder %v338, inf
        %v361 = vsel %vm360, %v338, %v359
        %vm362 = vcmp.eq.f32.partialorder %v338, 0.0
        %v363 = vand.u32 %v338, 2147483648
        %v364 = vsel %vm362, %v363, %v361
        %v365 = vrsqrt.pop %v339
        %v366 = vmul.f32 %v365, %v339
        %v367 = vmul.f32 %v366, %v365
        %v368 = vmul.f32 0.5, %v367
        %v369 = vsub.f32 1.5, %v368
        %v370 = vmul.f32 %v365, %v369
        %v371 = vmul.f32 %v339, %v370
        %vm372 = vcmp.eq.f32.partialorder %v339, inf
        %v373 = vsel %vm372, %v339, %v371
        %vm374 = vcmp.eq.f32.partialorder %v339, 0.0
        %v375 = vand.u32 %v339, 2147483648
        %v376 = vsel %vm374, %v375, %v373
        %v377 = vrsqrt.pop %v340
        %v378 = vmul.f32 %v377, %v340
        %v379 = vmul.f32 %v378, %v377
        %v380 = vmul.f32 0.5, %v379
        %v381 = vsub.f32 1.5, %v380
        %v382 = vmul.f32 %v377, %v381
        %v383 = vmul.f32 %v340, %v382
        %vm384 = vcmp.eq.f32.partialorder %v340, inf
        %v385 = vsel %vm384, %v340, %v383
        %vm386 = vcmp.eq.f32.partialorder %v340, 0.0
        %v387 = vand.u32 %v340, 2147483648
        %v388 = vsel %vm386, %v387, %v385
        %v389 = vmul.f32 %v352, %v337
        %v390 = vmul.f32 %v364, %v338
        %v391 = vmul.f32 %v376, %v339
        %v392 = vmul.f32 %v388, %v340
        %v393 = vadd.f32 %v389, %v390
        %v394 = vadd.f32 %v393, %v391
        %v395 = vadd.f32 %v394, %v392
        %v396 = vmul.f32 %v320, %v320
        %v397 = vmul.f32 %v321, %v321
        %v398 = vmul.f32 %v322, %v322
        %v399 = vmul.f32 %v323, %v323
        %v400 = vadd.f32 %v396, %v397
        %v401 = vadd.f32 %v400, %v398
        %v402 = vadd.f32 %v401, %v399
        %s403 = sadd.s32 %s32, %s34
        %s404 = smul.u32 %s403, 8
        %v405 = vlaneseq
        %v406 = vshrl.u32 %v405, 7
        %v407 = vstv %s404
        %v408 = vadd.s32 %v406, %v407
        %v409 = vlaneseq
        %v410 = vand.u32 %v409, 127
        %v411 = vmul.u32 %v408, 128
        %v412 = vadd.s32 %v411, %v410
        %vm413 = vcmp.lt.s32.totalorder %v412, 256
        %v414 = vsel %vm413, 1, 0
        %v415 = vcvt.s32.f32 %v414
        %v416 = vmul.f32 %v395, %v415
        %v417 = vmul.f32 %v402, %v415
        %v418 = vld [vmem:[%s268] sm:$0xff]
        %v419 = vadd.f32 %v416, 0.0
        %v420 = vadd.f32 %v418, %v419
        %421 = vst [vmem:[%s268] sm:$0xff] %v420
        %v422 = vld [vmem:[%s275] sm:$0xff]
        %v423 = vadd.f32 %v417, 0.0
        %v424 = vadd.f32 %v422, %v423
        %425 = vst [vmem:[%s275] sm:$0xff] %v424
        %s426 = sand.u32 %s116, 1
        %s427 = scalar_lea.sflag [#allocation4], %s426
        %s428 = sand.u32 %s116, 1
        %s429 = smul.addr %s428, 8
        %s430 = scalar_lea.vmem [#allocation7], %s429
        %s431 = sand.u32 %s144, 1
        %s432 = scalar_lea.sflag [#allocation9], %s431
        %s433 = sand.u32 %s144, 1
        %s434 = smul.addr %s433, 8
        %s435 = scalar_lea.vmem [#allocation8], %s434
        // Predicated region
        $region41: #{tpu_custom_call.1} parent=27 // pred_check
          %p436 = pneg %p126
        $region42: #{tpu_custom_call.1} parent=27 // pred_check_branch
          %438 = sbr.rel (%p436) target = $region44
        $region43: #{tpu_custom_call.1} parent=27 // pred_region
          %440 = vsyncadd %s427, 0
          %s441 = smul.addr %s32, 2
          %s442 = sadd.s32 %s33, %s441
          %s443 = smul.addr %s442, 8
          %s444 = scalar_lea.hbm %s2, %s443
          %s446 = sshll.u32 %s430, 4
          %s447 = int_to_ptr.vmem [resolvable:$true] %s446
          %s448 = sshll.u32 %s444, 4
          %s449 = int_to_ptr.hbm [resolvable:$true] %s448
          %451 = dma.vmem_to_hbm [thread:$0]  %s447, 128, %s449, %s427
        $region44: #{tpu_custom_call.1} parent=27 // pred_fallthru
          _
        // Predicated region
        $region45: #{tpu_custom_call.1} parent=27 // pred_check
          %p452 = pneg %p154
        $region46: #{tpu_custom_call.1} parent=27 // pred_check_branch
          %454 = sbr.rel (%p452) target = $region48
        $region47: #{tpu_custom_call.1} parent=27 // pred_region
          %456 = vsyncadd %s432, 0
          %s457 = smul.addr %s32, 2
          %s458 = sadd.s32 %s33, %s457
          %s459 = smul.addr %s458, 8
          %s460 = scalar_lea.hbm %s3, %s459
          %s462 = sshll.u32 %s435, 4
          %s463 = int_to_ptr.vmem [resolvable:$true] %s462
          %s464 = sshll.u32 %s460, 4
          %s465 = int_to_ptr.hbm [resolvable:$true] %s464
          %467 = dma.vmem_to_hbm [thread:$0]  %s463, 128, %s465, %s432
        $region48: #{tpu_custom_call.1} parent=27 // pred_fallthru
          _
      $region28: #{tpu_custom_call.1} parent=5 // pred_fallthru
        _
      %p468 = scmp.le.s32.totalorder 2, %s22
      // Predicated region
      $region49: #{tpu_custom_call.1} parent=5 // pred_check
        %p469 = pneg %p468
      $region50: #{tpu_custom_call.1} parent=5 // pred_check_branch
        %471 = sbr.rel (%p469) target = $region52
      $region51: #{tpu_custom_call.1} parent=5 // pred_region
        %s472 = ssub.s32 %s22, 2
        // Predicated region
        $region53: #{tpu_custom_call.1} parent=51 // pred_check
          %p473 = pneg %p132
        $region54: #{tpu_custom_call.1} parent=51 // pred_check_branch
          %475 = sbr.rel (%p473) target = $region56
        $region55: #{tpu_custom_call.1} parent=51 // pred_region
          %s476 = sand.u32 %s117, 1
          %s477 = scalar_lea.sflag [#allocation4], %s476
          %s478 = sand.u32 %s117, 1
          %s479 = smul.addr %s478, 8
          %s480 = scalar_lea.vmem [#allocation7], %s479
          %482 = dma.done %s477, 128
        $region56: #{tpu_custom_call.1} parent=51 // pred_fallthru
          _
        // Predicated region
        $region57: #{tpu_custom_call.1} parent=51 // pred_check
          %p483 = pneg %p160
        $region58: #{tpu_custom_call.1} parent=51 // pred_check_branch
          %485 = sbr.rel (%p483) target = $region60
        $region59: #{tpu_custom_call.1} parent=51 // pred_region
          %s486 = sand.u32 %s145, 1
          %s487 = scalar_lea.sflag [#allocation9], %s486
          %s488 = sand.u32 %s145, 1
          %s489 = smul.addr %s488, 8
          %s490 = scalar_lea.vmem [#allocation8], %s489
          %492 = dma.done %s487, 128
        $region60: #{tpu_custom_call.1} parent=51 // pred_fallthru
          _
      $region52: #{tpu_custom_call.1} parent=5 // pred_fallthru
        _
    $region6: #{tpu_custom_call.1} parent=1 // loop_footer
      %s26 = sadd.s32 1, %s22
    $region7: #{tpu_custom_call.1} parent=1 // loop_footer_branch
      %21 = sbr.rel target = $region3
    $region8: #{tpu_custom_call.1} parent=1 // loop_exit
      _
    %493 = vsyncpa [#allocation3], 1
    %s494 = scalar_lea.sflag [#allocation3], 1
    %495 = vsyncpa %s494, 1
    %496 = vsyncpa [#allocation6], 1
    %s497 = scalar_lea.sflag [#allocation6], 1
    %498 = vsyncpa %s497, 1
    %499 = vsyncpa [#allocation4], 1
    %s500 = scalar_lea.sflag [#allocation4], 1
    %501 = vsyncpa %s500, 1
    %502 = vsyncpa [#allocation9], 1
    %s503 = scalar_lea.sflag [#allocation9], 1
    %504 = vsyncpa %s503, 1

</llo_original>
